<compile_context>
chip_gen: v5e
topology: v5e:2x2
jax: 0.10.0
libtpu: 0.0.40
codegen_flags: <defaults>
</compile_context>

<pallas_src>
import functools

import jax
import jax.numpy as jnp
from jax.experimental import pallas as pl
from jax.experimental.pallas import tpu as pltpu

_EPS = 1e-6  # matches F.pairwise_distance default eps


def _triplet_loss_kernel(a_ref, p_ref, n_ref, o_ref, pos_acc, neg_acc, *,
                         margin, batch, feat, tile_b, tile_d, mask_rows,
                         mask_cols):
    i = pl.program_id(0)          # batch block
    j = pl.program_id(1)          # feature block (reduction axis, innermost)
    nd = pl.num_programs(1)

    # Upcast in-kernel; HBM traffic stays at the input dtype (e.g. bf16).
    a = a_ref[...].astype(jnp.float32)
    p = p_ref[...].astype(jnp.float32)
    n = n_ref[...].astype(jnp.float32)

    dp = a - p + _EPS
    dn = a - n + _EPS
    sq_p = dp * dp
    sq_n = dn * dn

    if mask_cols:
        # Last feature block may be partial: zero padded columns before the reduce.
        col = j * tile_d + jax.lax.broadcasted_iota(jnp.int32, sq_p.shape, 1)
        valid = col < feat
        sq_p = jnp.where(valid, sq_p, 0.0)
        sq_n = jnp.where(valid, sq_n, 0.0)

    # (tile_b, 1) keepdims partials keep the sublane layout.
    pos_part = jnp.sum(sq_p, axis=-1, keepdims=True)
    neg_part = jnp.sum(sq_n, axis=-1, keepdims=True)

    @pl.when(j == 0)
    def _():
        pos_acc[...] = jnp.zeros_like(pos_acc)
        neg_acc[...] = jnp.zeros_like(neg_acc)

    pos_acc[...] += pos_part
    neg_acc[...] += neg_part

    @pl.when(j == nd - 1)
    def _():
        hinge = jnp.maximum(
            jnp.sqrt(pos_acc[...]) - jnp.sqrt(neg_acc[...]) + margin, 0.0)
        if mask_rows:
            # Last batch block may be partial: zero padded rows before the reduce.
            row = i * tile_b + jax.lax.broadcasted_iota(jnp.int32, hinge.shape, 0)
            hinge = jnp.where(row < batch, hinge, 0.0)
        # Lane-dense (1, 8, 128) output block: one unmasked full-vreg store.
        o_ref[...] = jnp.full(o_ref.shape, jnp.sum(hinge), dtype=jnp.float32)


def triplet_loss(anchor, positive, negative, margin=1.0, *,
                 _tile_b=None, _tile_d=None):
    """anchor/positive/negative: (..., D) arrays (f32 or bf16). Returns scalar f32."""
    assert anchor.shape == positive.shape == negative.shape
    assert anchor.ndim >= 2
    D = anchor.shape[-1]
    a2 = anchor.reshape(-1, D)
    p2 = positive.reshape(-1, D)
    n2 = negative.reshape(-1, D)
    B = a2.shape[0]

    itemsize = max(jnp.dtype(x.dtype).itemsize for x in (a2, p2, n2))
    # Budget for 3 inputs x 2 pipeline buffers; conservative for every generation.
    vmem_budget = 12 * 1024 * 1024

    # ---- feature (lane) tile ----
    if _tile_d is not None:
        tile_d = int(_tile_d)
    elif 3 * 2 * 8 * D * itemsize <= vmem_budget:
        tile_d = D                      # whole feature dim fits: single-pass rows
    else:
        # Very wide rows: tile the feature dim (multiple of 128) and accumulate.
        col_cap = vmem_budget // (3 * 2 * 8 * itemsize)
        tile_d = max(128, (col_cap // 128) * 128)

    # ---- batch (sublane) tile ----
    if _tile_b is not None:
        tile_b = int(_tile_b)
    else:
        row_bytes = 3 * 2 * tile_d * itemsize
        cap = max(8, min(2048, (vmem_budget // row_bytes) // 8 * 8))
        tile_b = B if B <= cap else cap

    num_b = pl.cdiv(B, tile_b)
    num_d = pl.cdiv(D, tile_d)
    mask_rows = (B % tile_b) != 0
    mask_cols = (D % tile_d) != 0

    kernel = functools.partial(
        _triplet_loss_kernel,
        margin=float(margin), batch=B, feat=D,
        tile_b=tile_b, tile_d=tile_d,
        mask_rows=mask_rows, mask_cols=mask_cols)

    in_spec = pl.BlockSpec((tile_b, tile_d), lambda i, j: (i, j))
    partials = pl.pallas_call(
        kernel,
        out_shape=jax.ShapeDtypeStruct((num_b, 8, 128), jnp.float32),
        grid=(num_b, num_d),
        in_specs=[in_spec, in_spec, in_spec],
        out_specs=pl.BlockSpec((1, 8, 128), lambda i, j: (i, 0, 0)),
        scratch_shapes=[
            pltpu.VMEM((tile_b, 1), jnp.float32),   # pos sum-of-squares accumulator
            pltpu.VMEM((tile_b, 1), jnp.float32),   # neg sum-of-squares accumulator
        ],
        compiler_params=pltpu.CompilerParams(
            dimension_semantics=("parallel", "arbitrary"),
            vmem_limit_bytes=32 * 1024 * 1024,
        ),
    )(a2, p2, n2)

    # Per-block partial sums -> single mean over the true batch size.
    return jnp.sum(partials[:, 0, 0]) / jnp.float32(B)


def _reference(anchor, positive, negative, margin):
    a = anchor.astype(jnp.float32)
    p = positive.astype(jnp.float32)
    n = negative.astype(jnp.float32)
    pos_d = jnp.sqrt(jnp.sum((a - p + _EPS) ** 2, axis=-1))
    neg_d = jnp.sqrt(jnp.sum((a - n + _EPS) ** 2, axis=-1))
    return jnp.mean(jnp.maximum(pos_d - neg_d + margin, 0.0))


if __name__ == "__main__":
    key = jax.random.PRNGKey(0)
    margin = 1.0

    # 1) Small shape consistent with the module (B, D) embeddings; single block.
    B, D = 8, 32
    k_a, k_p, k_n, k2 = jax.random.split(key, 4)
    anchor = jax.random.normal(k_a, (B, D), dtype=jnp.float32)
    positive = jax.random.normal(k_p, (B, D), dtype=jnp.float32)
    negative = jax.random.normal(k_n, (B, D), dtype=jnp.float32)
    loss = triplet_loss(anchor, positive, negative, margin=margin)
    jax.block_until_ready(loss)
    ref = _reference(anchor, positive, negative, margin)
    assert jnp.allclose(loss, ref, atol=1e-5, rtol=1e-5), (loss, ref)

    # 2) Multi batch-block + partial (masked) last batch tile, default tiling.
    B2, D2 = 2050, 64
    k_a2, k_p2, k_n2, k3 = jax.random.split(k2, 4)
    a2 = jax.random.normal(k_a2, (B2, D2), dtype=jnp.float32)
    p2 = jax.random.normal(k_p2, (B2, D2), dtype=jnp.float32)
    n2 = jax.random.normal(k_n2, (B2, D2), dtype=jnp.float32)
    loss2 = triplet_loss(a2, p2, n2, margin=margin)
    jax.block_until_ready(loss2)
    ref2 = _reference(a2, p2, n2, margin)
    assert jnp.allclose(loss2, ref2, atol=1e-5, rtol=1e-5), (loss2, ref2)

    # 3) Forced small tiles: exercises feature-axis accumulation plus row AND
    #    column edge masking.
    B3, D3 = 20, 200
    k_a3, k_p3, k_n3, k4 = jax.random.split(k3, 4)
    a3 = jax.random.normal(k_a3, (B3, D3), dtype=jnp.float32)
    p3 = jax.random.normal(k_p3, (B3, D3), dtype=jnp.float32)
    n3 = jax.random.normal(k_n3, (B3, D3), dtype=jnp.float32)
    loss3 = triplet_loss(a3, p3, n3, margin=margin, _tile_b=8, _tile_d=128)
    jax.block_until_ready(loss3)
    ref3 = _reference(a3, p3, n3, margin)
    assert jnp.allclose(loss3, ref3, atol=1e-5, rtol=1e-5), (loss3, ref3)

    # 4) bf16 inputs (upcast happens in-kernel).
    k_a4, k_p4, k_n4 = jax.random.split(k4, 3)
    a4 = jax.random.normal(k_a4, (16, 48), dtype=jnp.bfloat16)
    p4 = jax.random.normal(k_p4, (16, 48), dtype=jnp.bfloat16)
    n4 = jax.random.normal(k_n4, (16, 48), dtype=jnp.bfloat16)
    loss4 = triplet_loss(a4, p4, n4, margin=margin)
    jax.block_until_ready(loss4)
    ref4 = _reference(a4, p4, n4, margin)
    assert jnp.allclose(loss4, ref4, atol=1e-3, rtol=1e-3), (loss4, ref4)

    print("KERNEL_OK")
</pallas_src>

<mosaic_0001>
module attributes {stable_mosaic.version = 11 : i64} {
  func.func @_triplet_loss_kernel(%arg0: i32, %arg1: i32, %arg2: memref<8x32xf32, #tpu.memory_space<vmem>>, %arg3: memref<8x32xf32, #tpu.memory_space<vmem>>, %arg4: memref<8x32xf32, #tpu.memory_space<vmem>>, %arg5: memref<1x8x128xf32, #tpu.memory_space<vmem>>, %arg6: memref<8x1xf32, #tpu.memory_space<vmem>>, %arg7: memref<8x1xf32, #tpu.memory_space<vmem>>) attributes {dimension_semantics = [#tpu.dimension_semantics<parallel>, #tpu.dimension_semantics<arbitrary>], iteration_bounds = array<i64: 1, 1>, scalar_prefetch = 0 : i64, scratch_operands = 2 : i64, tpu.core_type = #tpu.core_type<tc>, window_params = [{transform_indices = @transform_0, window_bounds = array<i64: 8, 32>}, {transform_indices = @transform_1, window_bounds = array<i64: 8, 32>}, {transform_indices = @transform_2, window_bounds = array<i64: 8, 32>}, {transform_indices = @transform_3, window_bounds = array<i64: 1, 8, 128>}]} {
    %c0 = arith.constant 0 : index
    %c0_0 = arith.constant 0 : index
    %0 = vector.load %arg2[%c0, %c0_0] : memref<8x32xf32, #tpu.memory_space<vmem>>, vector<8x32xf32>
    %c0_1 = arith.constant 0 : index
    %c0_2 = arith.constant 0 : index
    %1 = vector.load %arg3[%c0_1, %c0_2] : memref<8x32xf32, #tpu.memory_space<vmem>>, vector<8x32xf32>
    %c0_3 = arith.constant 0 : index
    %c0_4 = arith.constant 0 : index
    %2 = vector.load %arg4[%c0_3, %c0_4] : memref<8x32xf32, #tpu.memory_space<vmem>>, vector<8x32xf32>
    %3 = arith.subf %0, %1 : vector<8x32xf32>
    %cst = arith.constant 9.99999997E-7 : f32
    %4 = vector.broadcast %cst : f32 to vector<8x32xf32>
    %5 = arith.addf %3, %4 : vector<8x32xf32>
    %6 = arith.subf %0, %2 : vector<8x32xf32>
    %cst_5 = arith.constant 9.99999997E-7 : f32
    %7 = vector.broadcast %cst_5 : f32 to vector<8x32xf32>
    %8 = arith.addf %6, %7 : vector<8x32xf32>
    %9 = arith.mulf %5, %5 : vector<8x32xf32>
    %10 = arith.mulf %8, %8 : vector<8x32xf32>
    %cst_6 = arith.constant dense<0.000000e+00> : vector<8xf32>
    %11 = vector.multi_reduction <add>, %9, %cst_6 [1] : vector<8x32xf32> to vector<8xf32>
    %12 = vector.shape_cast %11 : vector<8xf32> to vector<8x1xf32>
    %cst_7 = arith.constant dense<0.000000e+00> : vector<8xf32>
    %13 = vector.multi_reduction <add>, %10, %cst_7 [1] : vector<8x32xf32> to vector<8xf32>
    %14 = vector.shape_cast %13 : vector<8xf32> to vector<8x1xf32>
    %c0_i32 = arith.constant 0 : i32
    %15 = arith.cmpi eq, %arg1, %c0_i32 : i32
    %16 = arith.extui %15 : i1 to i32
    %c0_i32_8 = arith.constant 0 : i32
    %17 = arith.cmpi ne, %16, %c0_i32_8 : i32
    scf.if %17 {
      %cst_19 = arith.constant 0.000000e+00 : f32
      %27 = vector.broadcast %cst_19 : f32 to vector<8x1xf32>
      %c0_20 = arith.constant 0 : index
      %c0_21 = arith.constant 0 : index
      %28 = vector.load %arg6[%c0_20, %c0_21] : memref<8x1xf32, #tpu.memory_space<vmem>>, vector<8x1xf32>
      tpu.vector_store %arg6[%c0_20, %c0_21], %27 {strides = array<i32>} : memref<8x1xf32, #tpu.memory_space<vmem>>, vector<8x1xf32>,
      %cst_22 = arith.constant 0.000000e+00 : f32
      %29 = vector.broadcast %cst_22 : f32 to vector<8x1xf32>
      %c0_23 = arith.constant 0 : index
      %c0_24 = arith.constant 0 : index
      %30 = vector.load %arg7[%c0_23, %c0_24] : memref<8x1xf32, #tpu.memory_space<vmem>>, vector<8x1xf32>
      tpu.vector_store %arg7[%c0_23, %c0_24], %29 {strides = array<i32>} : memref<8x1xf32, #tpu.memory_space<vmem>>, vector<8x1xf32>,
    } else {
    }
    %c0_9 = arith.constant 0 : index
    %c0_10 = arith.constant 0 : index
    %18 = vector.load %arg6[%c0_9, %c0_10] : memref<8x1xf32, #tpu.memory_space<vmem>>, vector<8x1xf32>
    %19 = arith.addf %18, %12 : vector<8x1xf32>
    %c0_11 = arith.constant 0 : index
    %c0_12 = arith.constant 0 : index
    %20 = vector.load %arg6[%c0_11, %c0_12] : memref<8x1xf32, #tpu.memory_space<vmem>>, vector<8x1xf32>
    tpu.vector_store %arg6[%c0_11, %c0_12], %19 {strides = array<i32>} : memref<8x1xf32, #tpu.memory_space<vmem>>, vector<8x1xf32>,
    %c0_13 = arith.constant 0 : index
    %c0_14 = arith.constant 0 : index
    %21 = vector.load %arg7[%c0_13, %c0_14] : memref<8x1xf32, #tpu.memory_space<vmem>>, vector<8x1xf32>
    %22 = arith.addf %21, %14 : vector<8x1xf32>
    %c0_15 = arith.constant 0 : index
    %c0_16 = arith.constant 0 : index
    %23 = vector.load %arg7[%c0_15, %c0_16] : memref<8x1xf32, #tpu.memory_space<vmem>>, vector<8x1xf32>
    tpu.vector_store %arg7[%c0_15, %c0_16], %22 {strides = array<i32>} : memref<8x1xf32, #tpu.memory_space<vmem>>, vector<8x1xf32>,
    %c0_i32_17 = arith.constant 0 : i32
    %24 = arith.cmpi eq, %arg1, %c0_i32_17 : i32
    %25 = arith.extui %24 : i1 to i32
    %c0_i32_18 = arith.constant 0 : i32
    %26 = arith.cmpi ne, %25, %c0_i32_18 : i32
    scf.if %26 {
      %c0_19 = arith.constant 0 : index
      %c0_20 = arith.constant 0 : index
      %27 = vector.load %arg6[%c0_19, %c0_20] : memref<8x1xf32, #tpu.memory_space<vmem>>, vector<8x1xf32>
      %28 = math.sqrt %27 : vector<8x1xf32>
      %c0_21 = arith.constant 0 : index
      %c0_22 = arith.constant 0 : index
      %29 = vector.load %arg7[%c0_21, %c0_22] : memref<8x1xf32, #tpu.memory_space<vmem>>, vector<8x1xf32>
      %30 = math.sqrt %29 : vector<8x1xf32>
      %31 = arith.subf %28, %30 : vector<8x1xf32>
      %cst_23 = arith.constant 1.000000e+00 : f32
      %32 = vector.broadcast %cst_23 : f32 to vector<8x1xf32>
      %33 = arith.addf %31, %32 : vector<8x1xf32>
      %cst_24 = arith.constant 0.000000e+00 : f32
      %34 = vector.broadcast %cst_24 : f32 to vector<8x1xf32>
      %35 = arith.maximumf %33, %34 : vector<8x1xf32>
      %36 = vector.shape_cast %35 : vector<8x1xf32> to vector<1x8x1xf32>
      %cst_25 = arith.constant dense<0.000000e+00> : vector<1xf32>
      %37 = vector.multi_reduction <add>, %36, %cst_25 [1, 2] : vector<1x8x1xf32> to vector<1xf32>
      %38 = vector.shape_cast %37 : vector<1xf32> to vector<1x1x1xf32>
      %39 = vector.extract %38[0, 0, 0] : f32 from vector<1x1x1xf32>
      %40 = vector.broadcast %39 : f32 to vector<1x8x128xf32>
      %c0_26 = arith.constant 0 : index
      %c0_27 = arith.constant 0 : index
      %c0_28 = arith.constant 0 : index
      %41 = vector.load %arg5[%c0_26, %c0_27, %c0_28] : memref<1x8x128xf32, #tpu.memory_space<vmem>>, vector<1x8x128xf32>
      tpu.vector_store %arg5[%c0_26, %c0_27, %c0_28], %40 {strides = array<i32>} : memref<1x8x128xf32, #tpu.memory_space<vmem>>, vector<1x8x128xf32>,
    } else {
    }
    return
  }
  func.func @transform_0(%arg0: i32, %arg1: i32) -> (i32, i32) {
    %c0_i32 = arith.constant 0 : i32
    return %arg0, %arg1 : i32, i32
  }
  func.func @transform_1(%arg0: i32, %arg1: i32) -> (i32, i32) {
    %c0_i32 = arith.constant 0 : i32
    return %arg0, %arg1 : i32, i32
  }
  func.func @transform_2(%arg0: i32, %arg1: i32) -> (i32, i32) {
    %c0_i32 = arith.constant 0 : i32
    return %arg0, %arg1 : i32, i32
  }
  func.func @transform_3(%arg0: i32, %arg1: i32) -> (i32, i32, i32) {
    %c0_i32 = arith.constant 0 : i32
    %c0_i32_0 = arith.constant 0 : i32
    %c0_i32_1 = arith.constant 0 : i32
    return %arg0, %c0_i32, %c0_i32_0 : i32, i32, i32
  }
}

</mosaic_0001>

<llo_original>
// kernel: tpu_custom_call.1
$region0: #{tpu_custom_call.1}
  #allocation0 [shape = 'u32[]', space=smem, size = 0x4, offset = 0x4, fixed_abs, tag = 'smem constant byte address 0x4 - core index']
  #allocation1 [shape = 'u32[72,128]{1,0:T(1,128)}', space=vmem, size = 0x9000, scoped, tag = 'internal scratch']
  #allocation2 [shape = 'f32[8,1]{1,0:T(8,128)}', space=vmem, size = 0x1000, scoped, tag = 'scratch operand']
  #allocation3 [shape = 'f32[8,1]{1,0:T(8,128)}', space=vmem, size = 0x1000, scoped, tag = 'scratch operand']
  %s0 = inlined_call_operand.hbm [shape: f32[8,32], index: 0, kind: input, shape index: {}]
  %s1 = inlined_call_operand.hbm [shape: f32[8,32], index: 1, kind: input, shape index: {}]
  %s2 = inlined_call_operand.hbm [shape: f32[8,32], index: 2, kind: input, shape index: {}]
  %s3 = inlined_call_operand.hbm [shape: f32[1,8,128], index: 3, kind: output, shape index: {}]
  %s4 = sld [smem:[#allocation0]]
  $region42: #{tpu_custom_call.1} parent=0
    _
  %s6 = ssub.s32 1, %s4
  %s7 = scalar_select 0, %s6, %s4
  $region1: #{tpu_custom_call.1} parent=0
    #allocation4 [shape = 'u8[4096]{0}', space=vmem, size = 0x1000, scoped, tag = 'input window, operand 0, single buffered']
    #allocation5 [shape = 's32[1]{0}', space=sflag, size = 0x4, scoped, tag = 'scoped memory for tpu_custom_call.1']
    #allocation6 [shape = 's32[1]{0}', space=sflag, size = 0x4, scoped, tag = 'scoped memory for tpu_custom_call.1']
    #allocation7 [shape = 'u8[4096]{0}', space=vmem, size = 0x1000, scoped, tag = 'input window, operand 1, single buffered']
    #allocation8 [shape = 's32[1]{0}', space=sflag, size = 0x4, scoped, tag = 'scoped memory for tpu_custom_call.1']
    #allocation9 [shape = 'u8[4096]{0}', space=vmem, size = 0x1000, scoped, tag = 'input window, operand 2, single buffered']
    #allocation10 [shape = 'u8[4096]{0}', space=vmem, size = 0x1000, scoped, tag = 'output window, operand 0, single buffered']
    %8 = vsyncpa [#allocation5], 0
    %9 = vsyncpa [#allocation8], 0
    %10 = vsyncpa [#allocation6], 0
    // Predicated region
    $region2: #{tpu_custom_call.1} parent=1 // pred_check
      _
    $region3: #{tpu_custom_call.1} parent=1 // pred_check_branch
      %12 = sbr.rel (0) target = $region5
    $region4: #{tpu_custom_call.1} parent=1 // pred_region
      %14 = vsyncadd [#allocation5], 0
      %s16 = sshll.u32 %s0, 4
      %s17 = int_to_ptr.hbm [resolvable:$true] %s16
      %s18 = sshll.u32 [#allocation4], 4
      %s19 = int_to_ptr.vmem [resolvable:$true] %s18
      %21 = dma.hbm_to_vmem [thread:$0]  %s17, 128, %s19, [#allocation5]
    $region5: #{tpu_custom_call.1} parent=1 // pred_fallthru
      _
    // Predicated region
    $region6: #{tpu_custom_call.1} parent=1 // pred_check
      _
    $region7: #{tpu_custom_call.1} parent=1 // pred_check_branch
      %23 = sbr.rel (0) target = $region9
    $region8: #{tpu_custom_call.1} parent=1 // pred_region
      %25 = vsyncadd [#allocation8], 0
      %s27 = sshll.u32 %s1, 4
      %s28 = int_to_ptr.hbm [resolvable:$true] %s27
      %s29 = sshll.u32 [#allocation7], 4
      %s30 = int_to_ptr.vmem [resolvable:$true] %s29
      %32 = dma.hbm_to_vmem [thread:$0]  %s28, 128, %s30, [#allocation8]
    $region9: #{tpu_custom_call.1} parent=1 // pred_fallthru
      _
    // Predicated region
    $region10: #{tpu_custom_call.1} parent=1 // pred_check
      _
    $region11: #{tpu_custom_call.1} parent=1 // pred_check_branch
      %34 = sbr.rel (0) target = $region13
    $region12: #{tpu_custom_call.1} parent=1 // pred_region
      %36 = vsyncadd [#allocation8], 0
      %s38 = sshll.u32 %s2, 4
      %s39 = int_to_ptr.hbm [resolvable:$true] %s38
      %s40 = sshll.u32 [#allocation9], 4
      %s41 = int_to_ptr.vmem [resolvable:$true] %s40
      %43 = dma.hbm_to_vmem [thread:$0]  %s39, 128, %s41, [#allocation8]
    $region13: #{tpu_custom_call.1} parent=1 // pred_fallthru
      _
    // Predicated region
    $region14: #{tpu_custom_call.1} parent=1 // pred_check
      _
    $region15: #{tpu_custom_call.1} parent=1 // pred_check_branch
      %45 = sbr.rel (0) target = $region17
    $region16: #{tpu_custom_call.1} parent=1 // pred_region
      %47 = dma.done [#allocation5], 128
    $region17: #{tpu_custom_call.1} parent=1 // pred_fallthru
      _
    // Predicated region
    $region18: #{tpu_custom_call.1} parent=1 // pred_check
      _
    $region19: #{tpu_custom_call.1} parent=1 // pred_check_branch
      %49 = sbr.rel (0) target = $region21
    $region20: #{tpu_custom_call.1} parent=1 // pred_region
      %51 = dma.done [#allocation8], 128
    $region21: #{tpu_custom_call.1} parent=1 // pred_fallthru
      _
    // Predicated region
    $region22: #{tpu_custom_call.1} parent=1 // pred_check
      _
    $region23: #{tpu_custom_call.1} parent=1 // pred_check_branch
      %53 = sbr.rel (0) target = $region25
    $region24: #{tpu_custom_call.1} parent=1 // pred_region
      %55 = dma.done [#allocation8], 128
    $region25: #{tpu_custom_call.1} parent=1 // pred_fallthru
      _
    %v56 = vld [vmem:[#allocation4] sm:$0xff]
    %v57 = vld [vmem:[#allocation7] sm:$0xff]
    %v58 = vld [vmem:[#allocation9] sm:$0xff]
    %v59 = vsub.f32 %v56, %v57
    %v60 = vadd.f32 %v59, 1e-06
    %v61 = vsub.f32 %v56, %v58
    %v62 = vadd.f32 %v61, 1e-06
    %v63 = vmul.f32 %v60, %v60
    %v64 = vmul.f32 %v62, %v62
    %vm65 = vcmask 261120
    %v66 = vsel %vm65, %v63, 0.0
    %67 = vadd.xlane.f32.xlu0 %v66
    %v68 = vpop.xlane.xlu0 %67
    %v69 = vsel %vm65, %v64, 0.0
    %70 = vadd.xlane.f32.xlu0 %v69
    %v71 = vpop.xlane.xlu0 %70
    %p72 = scmp.eq.s32.totalorder 0, 0
    // Predicated region
    $region26: #{tpu_custom_call.1} parent=1 // pred_check
      %p73 = pneg %p72
    $region27: #{tpu_custom_call.1} parent=1 // pred_check_branch
      %75 = sbr.rel (%p73) target = $region29
    $region28: #{tpu_custom_call.1} parent=1 // pred_region
      %vm76 = vcmask 7168
      %77 = vst.msk [vmem:[#allocation2] sm:$0xff] %vm76, 0.0
      %78 = vst.msk [vmem:[#allocation3] sm:$0xff] %vm76, 0.0
    $region29: #{tpu_custom_call.1} parent=1 // pred_fallthru
      _
    %v79 = vld [vmem:[#allocation2] sm:$0xff]
    %v80 = vadd.f32 %v79, %v68
    %vm81 = vcmask 7168
    %82 = vst.msk [vmem:[#allocation2] sm:$0xff] %vm81, %v80
    %v83 = vld [vmem:[#allocation3] sm:$0xff]
    %v84 = vadd.f32 %v83, %v71
    %85 = vst.msk [vmem:[#allocation3] sm:$0xff] %vm81, %v84
    // Predicated region
    $region30: #{tpu_custom_call.1} parent=1 // pred_check
      %p86 = pneg %p72
    $region31: #{tpu_custom_call.1} parent=1 // pred_check_branch
      %88 = sbr.rel (%p86) target = $region33
    $region32: #{tpu_custom_call.1} parent=1 // pred_region
      %v89 = vld [vmem:[#allocation2] sm:$0xff]
      %v90 = vrsqrt.pop %v89
      %v91 = vmul.f32 %v90, %v89
      %v92 = vmul.f32 %v91, %v90
      %v93 = vmul.f32 0.5, %v92
      %v94 = vsub.f32 1.5, %v93
      %v95 = vmul.f32 %v90, %v94
      %v96 = vmul.f32 %v89, %v95
      %vm97 = vcmp.eq.f32.partialorder %v89, inf
      %v98 = vsel %vm97, %v89, %v96
      %vm99 = vcmp.eq.f32.partialorder %v89, 0.0
      %v100 = vand.u32 %v89, 2147483648
      %v101 = vsel %vm99, %v100, %v98
      %v102 = vld [vmem:[#allocation3] sm:$0xff]
      %v103 = vrsqrt.pop %v102
      %v104 = vmul.f32 %v103, %v102
      %v105 = vmul.f32 %v104, %v103
      %v106 = vmul.f32 0.5, %v105
      %v107 = vsub.f32 1.5, %v106
      %v108 = vmul.f32 %v103, %v107
      %v109 = vmul.f32 %v102, %v108
      %vm110 = vcmp.eq.f32.partialorder %v102, inf
      %v111 = vsel %vm110, %v102, %v109
      %vm112 = vcmp.eq.f32.partialorder %v102, 0.0
      %v113 = vand.u32 %v102, 2147483648
      %v114 = vsel %vm112, %v113, %v111
      %v115 = vsub.f32 %v101, %v114
      %v116 = vadd.f32 %v115, 1.0
      %v117 = vmax.f32 %v116, 0.0
      %v118 = vsel %vm81, %v117, 0.0
      %119 = vadd.xlane.f32.xlu0 %v118
      %v120 = vpop.xlane.xlu0 %119
      %v121 = vrot.slane %v120, 4
      %v122 = vadd.f32 %v120, %v121
      %v123 = vrot.slane %v122, 2
      %v124 = vadd.f32 %v122, %v123
      %v125 = vrot.slane %v124, 1
      %v126 = vadd.f32 %v124, %v125
      %s127 = vtos %v126
      %v128 = vstv %s127
      %129 = vst [vmem:[#allocation10] sm:$0xff] %v128
    $region33: #{tpu_custom_call.1} parent=1 // pred_fallthru
      _
    // Predicated region
    $region34: #{tpu_custom_call.1} parent=1 // pred_check
      _
    $region35: #{tpu_custom_call.1} parent=1 // pred_check_branch
      %131 = sbr.rel (0) target = $region37
    $region36: #{tpu_custom_call.1} parent=1 // pred_region
      %133 = vsyncadd [#allocation6], 0
      %s135 = sshll.u32 [#allocation10], 4
      %s136 = int_to_ptr.vmem [resolvable:$true] %s135
      %s137 = sshll.u32 %s3, 4
      %s138 = int_to_ptr.hbm [resolvable:$true] %s137
      %140 = dma.vmem_to_hbm [thread:$0]  %s136, 128, %s138, [#allocation6]
    $region37: #{tpu_custom_call.1} parent=1 // pred_fallthru
      _
    // Predicated region
    $region38: #{tpu_custom_call.1} parent=1 // pred_check
      _
    $region39: #{tpu_custom_call.1} parent=1 // pred_check_branch
      %142 = sbr.rel (0) target = $region41
    $region40: #{tpu_custom_call.1} parent=1 // pred_region
      %144 = dma.done [#allocation6], 128
    $region41: #{tpu_custom_call.1} parent=1 // pred_fallthru
      _
    %145 = vsyncpa [#allocation5], 1
    %146 = vsyncpa [#allocation8], 1
    %147 = vsyncpa [#allocation6], 1

</llo_original>
